<compile_context>
chip_gen: v5e
topology: v5e:2x2
jax: 0.10.0
libtpu: 0.0.40
codegen_flags: <defaults>
</compile_context>

<pallas_src>
import functools

import jax
import jax.numpy as jnp
from jax.experimental import pallas as pl
from jax.experimental.pallas import tpu as pltpu

LN_EPS = 1e-5  # torch.nn.LayerNorm default


# ----------------------------- kernel helpers ------------------------------ #

def _layer_norm(y, gamma, beta):
    mean = jnp.mean(y, axis=-1, keepdims=True)
    var = jnp.mean(jnp.square(y - mean), axis=-1, keepdims=True)
    return (y - mean) * jax.lax.rsqrt(var + LN_EPS) * gamma + beta


def _masked_layer_norm(y, gamma, beta, mask, n):
    # LayerNorm over only the first `n` (real) columns of a lane-padded slab.
    mean = jnp.sum(jnp.where(mask, y, 0.0), axis=-1, keepdims=True) / n
    diff = jnp.where(mask, y - mean, 0.0)
    var = jnp.sum(diff * diff, axis=-1, keepdims=True) / n
    return (y - mean) * jax.lax.rsqrt(var + LN_EPS) * gamma + beta


# ----------------------------- fused kernel -------------------------------- #

def _fused_mlp_kernel(*refs, seq, hidden_layers, d_out, has_vsa, softmax):
    """Whole MLP forward in one kernel.

    All parameters are small and fully resident in VMEM; activations stay in
    vregs between layers (no HBM round-trips, single kernel launch).
    """
    refs = list(refs)
    o_ref = refs.pop()               # single output ref
    it = iter(refs)
    x_ref = next(it)                 # (seq, rows_pad, d_feat_in)

    if has_vsa:
        vsa_w = next(it)[...]        # (d_in, d_vsa)
        vsa_b = next(it)[...]        # (1, d_vsa)

    hidden = [(next(it), next(it), next(it), next(it)) for _ in range(hidden_layers)]
    if softmax:
        w_out = next(it)[...]        # (d_vsa, d_out_pad)  zero-padded columns
        b_out = next(it)[...]
        g_out = next(it)[...]
        beta_out = next(it)[...]

    rows = x_ref.shape[1]

    # ---- hidden layer 0: learnable_vsa projection + flatten folded in.
    # flatten(vsa_out) @ W0 == sum_s vsa_out[:, s, :] @ W0[s*F:(s+1)*F, :]
    w0_ref, b0_ref, g0_ref, beta0_ref = hidden[0]
    d_hidden = w0_ref.shape[1]
    feat = w0_ref.shape[0] // seq
    acc = jnp.zeros((rows, d_hidden), jnp.float32)
    for s in range(seq):                                   # static, unrolled
        xs = x_ref[s]                                      # (rows, d_feat_in)
        if has_vsa:
            xs = jnp.dot(xs, vsa_w, preferred_element_type=jnp.float32) + vsa_b
        acc = acc + jnp.dot(xs, w0_ref[pl.ds(s * feat, feat), :],
                            preferred_element_type=jnp.float32)
    h = jnp.maximum(_layer_norm(acc + b0_ref[...], g0_ref[...], beta0_ref[...]), 0.0)

    # ---- remaining hidden layers: Linear -> LayerNorm -> ReLU
    for i in range(1, hidden_layers):
        w_ref, b_ref, g_ref, beta_ref = hidden[i]
        y = jnp.dot(h, w_ref[...], preferred_element_type=jnp.float32) + b_ref[...]
        h = jnp.maximum(_layer_norm(y, g_ref[...], beta_ref[...]), 0.0)

    if not softmax:
        o_ref[...] = h
        return

    # ---- output stage: Linear -> LayerNorm -> Softmax on a lane-dense
    # (rows, d_out_pad) slab; only the first d_out columns enter the statistics
    # and the softmax sum (padded weight/bias/gamma/beta columns are zero).
    y = jnp.dot(h, w_out, preferred_element_type=jnp.float32) + b_out
    col = jax.lax.broadcasted_iota(jnp.int32, y.shape, 1)
    mask = col < d_out
    yn = _masked_layer_norm(y, g_out, beta_out, mask, float(d_out))
    m = jnp.max(jnp.where(mask, yn, -jnp.inf), axis=-1, keepdims=True)
    e = jnp.where(mask, jnp.exp(yn - m), 0.0)
    denom = jnp.sum(e, axis=-1, keepdims=True)
    o_ref[...] = e * pl.reciprocal(denom, approx=False)   # recip + mul, no per-lane divide


# ----------------------------- wrapper -------------------------------------- #

def _round_up(n, m):
    return ((n + m - 1) // m) * m


def mlp_forward_pallas(params, x, *, d_in, d_vsa, d_out, hidden_layers=3, softmax=True):
    """Fused Pallas forward matching MLP.forward (call under jax.jit)."""
    if x.ndim > 2:
        B, S = x.shape[0], x.shape[1]
        has_vsa = (d_in != d_vsa)
        xt = jnp.transpose(x, (1, 0, 2))          # (S, B, d_in): kernel indexes per seq slice
    else:
        B, S = x.shape[0], 1
        has_vsa = False
        xt = x[None]                              # (1, B, d)

    # Pad the row (batch) dim up to a multiple of 8 sublanes; sliced off at the end.
    B_pad = _round_up(B, 8)
    if B_pad != B:
        xt = jnp.pad(xt, ((0, 0), (0, B_pad - B), (0, 0)))

    inputs = [xt]
    if has_vsa:
        inputs += [params["vsa_w"], params["vsa_b"]]
    for i in range(hidden_layers):
        inputs += [params[f"w{i}"], params[f"b{i}"], params[f"g{i}"], params[f"beta{i}"]]

    if softmax:
        # Lane-dense output: pad the output feature dim to a multiple of 128.
        d_out_pad = _round_up(d_out, 128)
        pad = d_out_pad - d_out
        inputs += [
            jnp.pad(params["w_out"], ((0, 0), (0, pad))),
            jnp.pad(params["b_out"], ((0, 0), (0, pad))),
            jnp.pad(params["g_out"], ((0, 0), (0, pad))),
            jnp.pad(params["beta_out"], ((0, 0), (0, pad))),
        ]
        out_cols, real_cols = d_out_pad, d_out
    else:
        out_cols, real_cols = d_vsa, d_vsa

    kernel = functools.partial(
        _fused_mlp_kernel, seq=S, hidden_layers=hidden_layers,
        d_out=d_out, has_vsa=has_vsa, softmax=softmax)

    out = pl.pallas_call(
        kernel,
        out_shape=jax.ShapeDtypeStruct((B_pad, out_cols), jnp.float32),
        in_specs=[pl.BlockSpec(memory_space=pltpu.MemorySpace.VMEM)] * len(inputs),
        out_specs=pl.BlockSpec(memory_space=pltpu.MemorySpace.VMEM),
        # TODO(synk): at realistic sizes, add a row grid ("parallel") with weights kept
        # resident via index_map lambda i: (0, 0), and size tiles against per-core VMEM
        # (128 MiB on v5e/v6e, 64 MiB on v7x).
    )(*inputs)
    return out[:B, :real_cols]


# ----------------------------- params / reference --------------------------- #

def init_mlp_params(key, d_in, d_out, d_vsa, seq, hidden_layers=3, softmax=True):
    """Deterministic init mirroring the layer shapes of the PyTorch MLP."""
    params = {}
    keys = jax.random.split(key, 2 * (hidden_layers + 2))
    ki = 0

    def linear_init(k_w, k_b, fan_in, fan_out):
        bound = 1.0 / jnp.sqrt(jnp.float32(fan_in))
        w = jax.random.uniform(k_w, (fan_in, fan_out), jnp.float32, -bound, bound)
        b = jax.random.uniform(k_b, (1, fan_out), jnp.float32, -bound, bound)
        return w, b

    if d_in != d_vsa:  # learnable_vsa: Linear(d_in -> d_vsa)
        params["vsa_w"], params["vsa_b"] = linear_init(keys[ki], keys[ki + 1], d_in, d_vsa)
        ki += 2

    in_dim = seq * d_vsa if d_in != d_vsa else seq * d_in  # LazyLinear sees flattened input
    for i in range(hidden_layers):
        params[f"w{i}"], params[f"b{i}"] = linear_init(keys[ki], keys[ki + 1], in_dim, d_vsa)
        ki += 2
        params[f"g{i}"] = jnp.ones((1, d_vsa), jnp.float32)      # LayerNorm weight
        params[f"beta{i}"] = jnp.zeros((1, d_vsa), jnp.float32)  # LayerNorm bias
        in_dim = d_vsa

    if softmax:
        params["w_out"], params["b_out"] = linear_init(keys[ki], keys[ki + 1], d_vsa, d_out)
        ki += 2
        params["g_out"] = jnp.ones((1, d_out), jnp.float32)
        params["beta_out"] = jnp.zeros((1, d_out), jnp.float32)

    return params


def mlp_forward_ref(params, x, d_in, d_vsa, hidden_layers=3, softmax=True):
    """Pure-JAX reference (faithful transcription of the PyTorch forward)."""
    def ln(y, g, b):
        mean = jnp.mean(y, axis=-1, keepdims=True)
        var = jnp.mean(jnp.square(y - mean), axis=-1, keepdims=True)
        return (y - mean) * jax.lax.rsqrt(var + LN_EPS) * g + b

    if x.ndim > 2:
        if d_in != d_vsa:
            x = x @ params["vsa_w"] + params["vsa_b"]
        x = x.reshape(x.shape[0], -1)
    for i in range(hidden_layers):
        y = x @ params[f"w{i}"] + params[f"b{i}"]
        x = jnp.maximum(ln(y, params[f"g{i}"], params[f"beta{i}"]), 0.0)
    if softmax:
        y = x @ params["w_out"] + params["b_out"]
        y = ln(y, params["g_out"], params["beta_out"])
        x = jax.nn.softmax(y, axis=-1)
    return x


# ----------------------------- main ----------------------------------------- #

if __name__ == "__main__":
    # 3-D input (batch, seq, d_in), as implied by the forward.
    B, S, D_IN, D_VSA, D_OUT = 2, 4, 8, 32, 16
    HIDDEN_LAYERS, SOFTMAX = 3, True

    key = jax.random.PRNGKey(0)
    k_param, k_x = jax.random.split(key)
    params = init_mlp_params(k_param, D_IN, D_OUT, D_VSA, S, HIDDEN_LAYERS, SOFTMAX)
    x = jax.random.normal(k_x, (B, S, D_IN), jnp.float32)

    fwd = jax.jit(functools.partial(
        mlp_forward_pallas, d_in=D_IN, d_vsa=D_VSA, d_out=D_OUT,
        hidden_layers=HIDDEN_LAYERS, softmax=SOFTMAX))
    out = jax.block_until_ready(fwd(params, x))

    ref = mlp_forward_ref(params, x, D_IN, D_VSA, HIDDEN_LAYERS, SOFTMAX)
    assert out.shape == (B, D_OUT), out.shape
    err = float(jnp.max(jnp.abs(out - ref)))
    assert jnp.allclose(out, ref, atol=1e-5, rtol=1e-5), f"mismatch vs reference: {err}"

    print("KERNEL_OK")
</pallas_src>

<mosaic_0001>
module attributes {stable_mosaic.version = 11 : i64} {
  func.func @_fused_mlp_kernel(%arg0: memref<4x8x8xf32, #tpu.memory_space<vmem>>, %arg1: memref<8x32xf32, #tpu.memory_space<vmem>>, %arg2: memref<1x32xf32, #tpu.memory_space<vmem>>, %arg3: memref<128x32xf32, #tpu.memory_space<vmem>>, %arg4: memref<1x32xf32, #tpu.memory_space<vmem>>, %arg5: memref<1x32xf32, #tpu.memory_space<vmem>>, %arg6: memref<1x32xf32, #tpu.memory_space<vmem>>, %arg7: memref<32x32xf32, #tpu.memory_space<vmem>>, %arg8: memref<1x32xf32, #tpu.memory_space<vmem>>, %arg9: memref<1x32xf32, #tpu.memory_space<vmem>>, %arg10: memref<1x32xf32, #tpu.memory_space<vmem>>, %arg11: memref<32x32xf32, #tpu.memory_space<vmem>>, %arg12: memref<1x32xf32, #tpu.memory_space<vmem>>, %arg13: memref<1x32xf32, #tpu.memory_space<vmem>>, %arg14: memref<1x32xf32, #tpu.memory_space<vmem>>, %arg15: memref<32x128xf32, #tpu.memory_space<vmem>>, %arg16: memref<1x128xf32, #tpu.memory_space<vmem>>, %arg17: memref<1x128xf32, #tpu.memory_space<vmem>>, %arg18: memref<1x128xf32, #tpu.memory_space<vmem>>, %arg19: memref<8x128xf32, #tpu.memory_space<vmem>>) attributes {dimension_semantics = [], scalar_prefetch = 0 : i64, scratch_operands = 0 : i64, tpu.core_type = #tpu.core_type<tc>} {
    %c0 = arith.constant 0 : index
    %c0_0 = arith.constant 0 : index
    %0 = vector.load %arg1[%c0, %c0_0] : memref<8x32xf32, #tpu.memory_space<vmem>>, vector<8x32xf32>
    %c0_1 = arith.constant 0 : index
    %c0_2 = arith.constant 0 : index
    %1 = vector.load %arg2[%c0_1, %c0_2] : memref<1x32xf32, #tpu.memory_space<vmem>>, vector<1x32xf32>
    %c0_3 = arith.constant 0 : index
    %c0_4 = arith.constant 0 : index
    %2 = vector.load %arg15[%c0_3, %c0_4] : memref<32x128xf32, #tpu.memory_space<vmem>>, vector<32x128xf32>
    %c0_5 = arith.constant 0 : index
    %c0_6 = arith.constant 0 : index
    %3 = vector.load %arg16[%c0_5, %c0_6] : memref<1x128xf32, #tpu.memory_space<vmem>>, vector<1x128xf32>
    %c0_7 = arith.constant 0 : index
    %c0_8 = arith.constant 0 : index
    %4 = vector.load %arg17[%c0_7, %c0_8] : memref<1x128xf32, #tpu.memory_space<vmem>>, vector<1x128xf32>
    %c0_9 = arith.constant 0 : index
    %c0_10 = arith.constant 0 : index
    %5 = vector.load %arg18[%c0_9, %c0_10] : memref<1x128xf32, #tpu.memory_space<vmem>>, vector<1x128xf32>
    %cst = arith.constant 0.000000e+00 : f32
    %6 = vector.broadcast %cst : f32 to vector<8x32xf32>
    %c0_11 = arith.constant 0 : index
    %c0_12 = arith.constant 0 : index
    %c0_13 = arith.constant 0 : index
    %7 = vector.load %arg0[%c0_11, %c0_12, %c0_13] : memref<4x8x8xf32, #tpu.memory_space<vmem>>, vector<1x8x8xf32>
    %8 = vector.shape_cast %7 : vector<1x8x8xf32> to vector<8x8xf32>
    %cst_14 = arith.constant dense<0.000000e+00> : vector<8x32xf32>
    %9 = tpu.matmul %8, %0, %cst_14 {dimension_numbers = #tpu.dot_dimension_numbers<[1], [0], [0], [1], [0, 0, 1, 1], [], []>} : vector<8x8xf32>, vector<8x32xf32>, vector<8x32xf32> -> vector<8x32xf32>
    %10 = vector.broadcast %1 : vector<1x32xf32> to vector<8x32xf32>
    %11 = arith.addf %9, %10 : vector<8x32xf32>
    %c0_15 = arith.constant 0 : index
    %c0_16 = arith.constant 0 : index
    %12 = vector.load %arg3[%c0_15, %c0_16] : memref<128x32xf32, #tpu.memory_space<vmem>>, vector<32x32xf32>
    %cst_17 = arith.constant dense<0.000000e+00> : vector<8x32xf32>
    %13 = tpu.matmul %11, %12, %cst_17 {dimension_numbers = #tpu.dot_dimension_numbers<[1], [0], [0], [1], [0, 0, 1, 1], [], []>} : vector<8x32xf32>, vector<32x32xf32>, vector<8x32xf32> -> vector<8x32xf32>
    %14 = arith.addf %6, %13 : vector<8x32xf32>
    %c1 = arith.constant 1 : index
    %c0_18 = arith.constant 0 : index
    %c0_19 = arith.constant 0 : index
    %15 = vector.load %arg0[%c1, %c0_18, %c0_19] : memref<4x8x8xf32, #tpu.memory_space<vmem>>, vector<1x8x8xf32>
    %16 = vector.shape_cast %15 : vector<1x8x8xf32> to vector<8x8xf32>
    %cst_20 = arith.constant dense<0.000000e+00> : vector<8x32xf32>
    %17 = tpu.matmul %16, %0, %cst_20 {dimension_numbers = #tpu.dot_dimension_numbers<[1], [0], [0], [1], [0, 0, 1, 1], [], []>} : vector<8x8xf32>, vector<8x32xf32>, vector<8x32xf32> -> vector<8x32xf32>
    %18 = vector.broadcast %1 : vector<1x32xf32> to vector<8x32xf32>
    %19 = arith.addf %17, %18 : vector<8x32xf32>
    %c32 = arith.constant 32 : index
    %c0_21 = arith.constant 0 : index
    %20 = vector.load %arg3[%c32, %c0_21] : memref<128x32xf32, #tpu.memory_space<vmem>>, vector<32x32xf32>
    %cst_22 = arith.constant dense<0.000000e+00> : vector<8x32xf32>
    %21 = tpu.matmul %19, %20, %cst_22 {dimension_numbers = #tpu.dot_dimension_numbers<[1], [0], [0], [1], [0, 0, 1, 1], [], []>} : vector<8x32xf32>, vector<32x32xf32>, vector<8x32xf32> -> vector<8x32xf32>
    %22 = arith.addf %14, %21 : vector<8x32xf32>
    %c2 = arith.constant 2 : index
    %c0_23 = arith.constant 0 : index
    %c0_24 = arith.constant 0 : index
    %23 = vector.load %arg0[%c2, %c0_23, %c0_24] : memref<4x8x8xf32, #tpu.memory_space<vmem>>, vector<1x8x8xf32>
    %24 = vector.shape_cast %23 : vector<1x8x8xf32> to vector<8x8xf32>
    %cst_25 = arith.constant dense<0.000000e+00> : vector<8x32xf32>
    %25 = tpu.matmul %24, %0, %cst_25 {dimension_numbers = #tpu.dot_dimension_numbers<[1], [0], [0], [1], [0, 0, 1, 1], [], []>} : vector<8x8xf32>, vector<8x32xf32>, vector<8x32xf32> -> vector<8x32xf32>
    %26 = vector.broadcast %1 : vector<1x32xf32> to vector<8x32xf32>
    %27 = arith.addf %25, %26 : vector<8x32xf32>
    %c64 = arith.constant 64 : index
    %c0_26 = arith.constant 0 : index
    %28 = vector.load %arg3[%c64, %c0_26] : memref<128x32xf32, #tpu.memory_space<vmem>>, vector<32x32xf32>
    %cst_27 = arith.constant dense<0.000000e+00> : vector<8x32xf32>
    %29 = tpu.matmul %27, %28, %cst_27 {dimension_numbers = #tpu.dot_dimension_numbers<[1], [0], [0], [1], [0, 0, 1, 1], [], []>} : vector<8x32xf32>, vector<32x32xf32>, vector<8x32xf32> -> vector<8x32xf32>
    %30 = arith.addf %22, %29 : vector<8x32xf32>
    %c3 = arith.constant 3 : index
    %c0_28 = arith.constant 0 : index
    %c0_29 = arith.constant 0 : index
    %31 = vector.load %arg0[%c3, %c0_28, %c0_29] : memref<4x8x8xf32, #tpu.memory_space<vmem>>, vector<1x8x8xf32>
    %32 = vector.shape_cast %31 : vector<1x8x8xf32> to vector<8x8xf32>
    %cst_30 = arith.constant dense<0.000000e+00> : vector<8x32xf32>
    %33 = tpu.matmul %32, %0, %cst_30 {dimension_numbers = #tpu.dot_dimension_numbers<[1], [0], [0], [1], [0, 0, 1, 1], [], []>} : vector<8x8xf32>, vector<8x32xf32>, vector<8x32xf32> -> vector<8x32xf32>
    %34 = vector.broadcast %1 : vector<1x32xf32> to vector<8x32xf32>
    %35 = arith.addf %33, %34 : vector<8x32xf32>
    %c96 = arith.constant 96 : index
    %c0_31 = arith.constant 0 : index
    %36 = vector.load %arg3[%c96, %c0_31] : memref<128x32xf32, #tpu.memory_space<vmem>>, vector<32x32xf32>
    %cst_32 = arith.constant dense<0.000000e+00> : vector<8x32xf32>
    %37 = tpu.matmul %35, %36, %cst_32 {dimension_numbers = #tpu.dot_dimension_numbers<[1], [0], [0], [1], [0, 0, 1, 1], [], []>} : vector<8x32xf32>, vector<32x32xf32>, vector<8x32xf32> -> vector<8x32xf32>
    %38 = arith.addf %30, %37 : vector<8x32xf32>
    %c0_33 = arith.constant 0 : index
    %c0_34 = arith.constant 0 : index
    %39 = vector.load %arg4[%c0_33, %c0_34] : memref<1x32xf32, #tpu.memory_space<vmem>>, vector<1x32xf32>
    %40 = vector.broadcast %39 : vector<1x32xf32> to vector<8x32xf32>
    %41 = arith.addf %38, %40 : vector<8x32xf32>
    %c0_35 = arith.constant 0 : index
    %c0_36 = arith.constant 0 : index
    %42 = vector.load %arg5[%c0_35, %c0_36] : memref<1x32xf32, #tpu.memory_space<vmem>>, vector<1x32xf32>
    %c0_37 = arith.constant 0 : index
    %c0_38 = arith.constant 0 : index
    %43 = vector.load %arg6[%c0_37, %c0_38] : memref<1x32xf32, #tpu.memory_space<vmem>>, vector<1x32xf32>
    %cst_39 = arith.constant dense<0.000000e+00> : vector<8xf32>
    %44 = vector.multi_reduction <add>, %41, %cst_39 [1] : vector<8x32xf32> to vector<8xf32>
    %45 = vector.shape_cast %44 : vector<8xf32> to vector<8x1xf32>
    %cst_40 = arith.constant 3.200000e+01 : f32
    %46 = vector.broadcast %cst_40 : f32 to vector<8x1xf32>
    %47 = arith.divf %45, %46 : vector<8x1xf32>
    %48 = vector.broadcast %47 : vector<8x1xf32> to vector<8x32xf32>
    %49 = arith.subf %41, %48 : vector<8x32xf32>
    %50 = arith.mulf %49, %49 : vector<8x32xf32>
    %cst_41 = arith.constant dense<0.000000e+00> : vector<8xf32>
    %51 = vector.multi_reduction <add>, %50, %cst_41 [1] : vector<8x32xf32> to vector<8xf32>
    %52 = vector.shape_cast %51 : vector<8xf32> to vector<8x1xf32>
    %cst_42 = arith.constant 3.200000e+01 : f32
    %53 = vector.broadcast %cst_42 : f32 to vector<8x1xf32>
    %54 = arith.divf %52, %53 : vector<8x1xf32>
    %55 = vector.broadcast %47 : vector<8x1xf32> to vector<8x32xf32>
    %56 = arith.subf %41, %55 : vector<8x32xf32>
    %cst_43 = arith.constant 9.99999974E-6 : f32
    %57 = vector.broadcast %cst_43 : f32 to vector<8x1xf32>
    %58 = arith.addf %54, %57 : vector<8x1xf32>
    %59 = math.rsqrt %58 : vector<8x1xf32>
    %60 = vector.broadcast %59 : vector<8x1xf32> to vector<8x32xf32>
    %61 = arith.mulf %56, %60 : vector<8x32xf32>
    %62 = vector.broadcast %42 : vector<1x32xf32> to vector<8x32xf32>
    %63 = arith.mulf %61, %62 : vector<8x32xf32>
    %64 = vector.broadcast %43 : vector<1x32xf32> to vector<8x32xf32>
    %65 = arith.addf %63, %64 : vector<8x32xf32>
    %cst_44 = arith.constant 0.000000e+00 : f32
    %66 = vector.broadcast %cst_44 : f32 to vector<8x32xf32>
    %67 = arith.maximumf %65, %66 : vector<8x32xf32>
    %c0_45 = arith.constant 0 : index
    %c0_46 = arith.constant 0 : index
    %68 = vector.load %arg7[%c0_45, %c0_46] : memref<32x32xf32, #tpu.memory_space<vmem>>, vector<32x32xf32>
    %cst_47 = arith.constant dense<0.000000e+00> : vector<8x32xf32>
    %69 = tpu.matmul %67, %68, %cst_47 {dimension_numbers = #tpu.dot_dimension_numbers<[1], [0], [0], [1], [0, 0, 1, 1], [], []>} : vector<8x32xf32>, vector<32x32xf32>, vector<8x32xf32> -> vector<8x32xf32>
    %c0_48 = arith.constant 0 : index
    %c0_49 = arith.constant 0 : index
    %70 = vector.load %arg8[%c0_48, %c0_49] : memref<1x32xf32, #tpu.memory_space<vmem>>, vector<1x32xf32>
    %71 = vector.broadcast %70 : vector<1x32xf32> to vector<8x32xf32>
    %72 = arith.addf %69, %71 : vector<8x32xf32>
    %c0_50 = arith.constant 0 : index
    %c0_51 = arith.constant 0 : index
    %73 = vector.load %arg9[%c0_50, %c0_51] : memref<1x32xf32, #tpu.memory_space<vmem>>, vector<1x32xf32>
    %c0_52 = arith.constant 0 : index
    %c0_53 = arith.constant 0 : index
    %74 = vector.load %arg10[%c0_52, %c0_53] : memref<1x32xf32, #tpu.memory_space<vmem>>, vector<1x32xf32>
    %cst_54 = arith.constant dense<0.000000e+00> : vector<8xf32>
    %75 = vector.multi_reduction <add>, %72, %cst_54 [1] : vector<8x32xf32> to vector<8xf32>
    %76 = vector.shape_cast %75 : vector<8xf32> to vector<8x1xf32>
    %cst_55 = arith.constant 3.200000e+01 : f32
    %77 = vector.broadcast %cst_55 : f32 to vector<8x1xf32>
    %78 = arith.divf %76, %77 : vector<8x1xf32>
    %79 = vector.broadcast %78 : vector<8x1xf32> to vector<8x32xf32>
    %80 = arith.subf %72, %79 : vector<8x32xf32>
    %81 = arith.mulf %80, %80 : vector<8x32xf32>
    %cst_56 = arith.constant dense<0.000000e+00> : vector<8xf32>
    %82 = vector.multi_reduction <add>, %81, %cst_56 [1] : vector<8x32xf32> to vector<8xf32>
    %83 = vector.shape_cast %82 : vector<8xf32> to vector<8x1xf32>
    %cst_57 = arith.constant 3.200000e+01 : f32
    %84 = vector.broadcast %cst_57 : f32 to vector<8x1xf32>
    %85 = arith.divf %83, %84 : vector<8x1xf32>
    %86 = vector.broadcast %78 : vector<8x1xf32> to vector<8x32xf32>
    %87 = arith.subf %72, %86 : vector<8x32xf32>
    %cst_58 = arith.constant 9.99999974E-6 : f32
    %88 = vector.broadcast %cst_58 : f32 to vector<8x1xf32>
    %89 = arith.addf %85, %88 : vector<8x1xf32>
    %90 = math.rsqrt %89 : vector<8x1xf32>
    %91 = vector.broadcast %90 : vector<8x1xf32> to vector<8x32xf32>
    %92 = arith.mulf %87, %91 : vector<8x32xf32>
    %93 = vector.broadcast %73 : vector<1x32xf32> to vector<8x32xf32>
    %94 = arith.mulf %92, %93 : vector<8x32xf32>
    %95 = vector.broadcast %74 : vector<1x32xf32> to vector<8x32xf32>
    %96 = arith.addf %94, %95 : vector<8x32xf32>
    %cst_59 = arith.constant 0.000000e+00 : f32
    %97 = vector.broadcast %cst_59 : f32 to vector<8x32xf32>
    %98 = arith.maximumf %96, %97 : vector<8x32xf32>
    %c0_60 = arith.constant 0 : index
    %c0_61 = arith.constant 0 : index
    %99 = vector.load %arg11[%c0_60, %c0_61] : memref<32x32xf32, #tpu.memory_space<vmem>>, vector<32x32xf32>
    %cst_62 = arith.constant dense<0.000000e+00> : vector<8x32xf32>
    %100 = tpu.matmul %98, %99, %cst_62 {dimension_numbers = #tpu.dot_dimension_numbers<[1], [0], [0], [1], [0, 0, 1, 1], [], []>} : vector<8x32xf32>, vector<32x32xf32>, vector<8x32xf32> -> vector<8x32xf32>
    %c0_63 = arith.constant 0 : index
    %c0_64 = arith.constant 0 : index
    %101 = vector.load %arg12[%c0_63, %c0_64] : memref<1x32xf32, #tpu.memory_space<vmem>>, vector<1x32xf32>
    %102 = vector.broadcast %101 : vector<1x32xf32> to vector<8x32xf32>
    %103 = arith.addf %100, %102 : vector<8x32xf32>
    %c0_65 = arith.constant 0 : index
    %c0_66 = arith.constant 0 : index
    %104 = vector.load %arg13[%c0_65, %c0_66] : memref<1x32xf32, #tpu.memory_space<vmem>>, vector<1x32xf32>
    %c0_67 = arith.constant 0 : index
    %c0_68 = arith.constant 0 : index
    %105 = vector.load %arg14[%c0_67, %c0_68] : memref<1x32xf32, #tpu.memory_space<vmem>>, vector<1x32xf32>
    %cst_69 = arith.constant dense<0.000000e+00> : vector<8xf32>
    %106 = vector.multi_reduction <add>, %103, %cst_69 [1] : vector<8x32xf32> to vector<8xf32>
    %107 = vector.shape_cast %106 : vector<8xf32> to vector<8x1xf32>
    %cst_70 = arith.constant 3.200000e+01 : f32
    %108 = vector.broadcast %cst_70 : f32 to vector<8x1xf32>
    %109 = arith.divf %107, %108 : vector<8x1xf32>
    %110 = vector.broadcast %109 : vector<8x1xf32> to vector<8x32xf32>
    %111 = arith.subf %103, %110 : vector<8x32xf32>
    %112 = arith.mulf %111, %111 : vector<8x32xf32>
    %cst_71 = arith.constant dense<0.000000e+00> : vector<8xf32>
    %113 = vector.multi_reduction <add>, %112, %cst_71 [1] : vector<8x32xf32> to vector<8xf32>
    %114 = vector.shape_cast %113 : vector<8xf32> to vector<8x1xf32>
    %cst_72 = arith.constant 3.200000e+01 : f32
    %115 = vector.broadcast %cst_72 : f32 to vector<8x1xf32>
    %116 = arith.divf %114, %115 : vector<8x1xf32>
    %117 = vector.broadcast %109 : vector<8x1xf32> to vector<8x32xf32>
    %118 = arith.subf %103, %117 : vector<8x32xf32>
    %cst_73 = arith.constant 9.99999974E-6 : f32
    %119 = vector.broadcast %cst_73 : f32 to vector<8x1xf32>
    %120 = arith.addf %116, %119 : vector<8x1xf32>
    %121 = math.rsqrt %120 : vector<8x1xf32>
    %122 = vector.broadcast %121 : vector<8x1xf32> to vector<8x32xf32>
    %123 = arith.mulf %118, %122 : vector<8x32xf32>
    %124 = vector.broadcast %104 : vector<1x32xf32> to vector<8x32xf32>
    %125 = arith.mulf %123, %124 : vector<8x32xf32>
    %126 = vector.broadcast %105 : vector<1x32xf32> to vector<8x32xf32>
    %127 = arith.addf %125, %126 : vector<8x32xf32>
    %cst_74 = arith.constant 0.000000e+00 : f32
    %128 = vector.broadcast %cst_74 : f32 to vector<8x32xf32>
    %129 = arith.maximumf %127, %128 : vector<8x32xf32>
    %cst_75 = arith.constant dense<0.000000e+00> : vector<8x128xf32>
    %130 = tpu.matmul %129, %2, %cst_75 {dimension_numbers = #tpu.dot_dimension_numbers<[1], [0], [0], [1], [0, 0, 1, 1], [], []>} : vector<8x32xf32>, vector<32x128xf32>, vector<8x128xf32> -> vector<8x128xf32>
    %131 = vector.broadcast %3 : vector<1x128xf32> to vector<8x128xf32>
    %132 = arith.addf %130, %131 : vector<8x128xf32>
    %133 = tpu.iota {dimensions = array<i32: 1>} : vector<8x128xi32>
    %c16_i32 = arith.constant 16 : i32
    %134 = vector.broadcast %c16_i32 : i32 to vector<8x128xi32>
    %135 = arith.cmpi slt, %133, %134 : vector<8x128xi32>
    %cst_76 = arith.constant 0.000000e+00 : f32
    %136 = vector.broadcast %cst_76 : f32 to vector<8x128xf32>
    %137 = arith.select %135, %132, %136 : vector<8x128xi1>, vector<8x128xf32>
    %cst_77 = arith.constant dense<0.000000e+00> : vector<8xf32>
    %138 = vector.multi_reduction <add>, %137, %cst_77 [1] : vector<8x128xf32> to vector<8xf32>
    %139 = vector.shape_cast %138 : vector<8xf32> to vector<8x1xf32>
    %cst_78 = arith.constant 1.600000e+01 : f32
    %140 = vector.broadcast %cst_78 : f32 to vector<8x1xf32>
    %141 = arith.divf %139, %140 : vector<8x1xf32>
    %142 = vector.broadcast %141 : vector<8x1xf32> to vector<8x128xf32>
    %143 = arith.subf %132, %142 : vector<8x128xf32>
    %cst_79 = arith.constant 0.000000e+00 : f32
    %144 = vector.broadcast %cst_79 : f32 to vector<8x128xf32>
    %145 = arith.select %135, %143, %144 : vector<8x128xi1>, vector<8x128xf32>
    %146 = arith.mulf %145, %145 : vector<8x128xf32>
    %cst_80 = arith.constant dense<0.000000e+00> : vector<8xf32>
    %147 = vector.multi_reduction <add>, %146, %cst_80 [1] : vector<8x128xf32> to vector<8xf32>
    %148 = vector.shape_cast %147 : vector<8xf32> to vector<8x1xf32>
    %cst_81 = arith.constant 1.600000e+01 : f32
    %149 = vector.broadcast %cst_81 : f32 to vector<8x1xf32>
    %150 = arith.divf %148, %149 : vector<8x1xf32>
    %151 = vector.broadcast %141 : vector<8x1xf32> to vector<8x128xf32>
    %152 = arith.subf %132, %151 : vector<8x128xf32>
    %cst_82 = arith.constant 9.99999974E-6 : f32
    %153 = vector.broadcast %cst_82 : f32 to vector<8x1xf32>
    %154 = arith.addf %150, %153 : vector<8x1xf32>
    %155 = math.rsqrt %154 : vector<8x1xf32>
    %156 = vector.broadcast %155 : vector<8x1xf32> to vector<8x128xf32>
    %157 = arith.mulf %152, %156 : vector<8x128xf32>
    %158 = vector.broadcast %4 : vector<1x128xf32> to vector<8x128xf32>
    %159 = arith.mulf %157, %158 : vector<8x128xf32>
    %160 = vector.broadcast %5 : vector<1x128xf32> to vector<8x128xf32>
    %161 = arith.addf %159, %160 : vector<8x128xf32>
    %cst_83 = arith.constant 0xFF800000 : f32
    %162 = vector.broadcast %cst_83 : f32 to vector<8x128xf32>
    %163 = arith.select %135, %161, %162 : vector<8x128xi1>, vector<8x128xf32>
    %cst_84 = arith.constant dense<0xFF800000> : vector<8xf32>
    %164 = vector.multi_reduction <maximumf>, %163, %cst_84 [1] : vector<8x128xf32> to vector<8xf32>
    %165 = vector.shape_cast %164 : vector<8xf32> to vector<8x1xf32>
    %166 = vector.broadcast %165 : vector<8x1xf32> to vector<8x128xf32>
    %167 = arith.subf %161, %166 : vector<8x128xf32>
    %168 = math.exp %167 : vector<8x128xf32>
    %cst_85 = arith.constant 0.000000e+00 : f32
    %169 = vector.broadcast %cst_85 : f32 to vector<8x128xf32>
    %170 = arith.select %135, %168, %169 : vector<8x128xi1>, vector<8x128xf32>
    %cst_86 = arith.constant dense<0.000000e+00> : vector<8xf32>
    %171 = vector.multi_reduction <add>, %170, %cst_86 [1] : vector<8x128xf32> to vector<8xf32>
    %172 = vector.shape_cast %171 : vector<8xf32> to vector<8x1xf32>
    %173 = tpu.reciprocal %172 : vector<8x1xf32> -> vector<8x1xf32>
    %174 = vector.broadcast %173 : vector<8x1xf32> to vector<8x128xf32>
    %175 = arith.mulf %170, %174 : vector<8x128xf32>
    %c0_87 = arith.constant 0 : index
    %c0_88 = arith.constant 0 : index
    %176 = vector.load %arg19[%c0_87, %c0_88] : memref<8x128xf32, #tpu.memory_space<vmem>>, vector<8x128xf32>
    tpu.vector_store %arg19[%c0_87, %c0_88], %175 {strides = array<i32>} : memref<8x128xf32, #tpu.memory_space<vmem>>, vector<8x128xf32>,
    return
  }
}

</mosaic_0001>

<llo_original>
// kernel: mlp_forward_pallas.1
$region0: #{mlp_forward_pallas.1}
  #allocation0 [shape = 'u32[]', space=smem, size = 0x4, offset = 0x4, fixed_abs, tag = 'smem constant byte address 0x4 - core index']
  #allocation1 [shape = 'u32[72,128]{1,0:T(1,128)}', space=vmem, size = 0x9000, scoped, tag = 'internal scratch']
  %s0 = inlined_call_operand.vmem [shape: f32[4,8,8], index: 0, kind: input, shape index: {}]
  %s1 = inlined_call_operand.vmem [shape: f32[8,32], index: 1, kind: input, shape index: {}]
  %s2 = inlined_call_operand.vmem [shape: f32[1,32], index: 2, kind: input, shape index: {}]
  %s3 = inlined_call_operand.vmem [shape: f32[128,32], index: 3, kind: input, shape index: {}]
  %s4 = inlined_call_operand.vmem [shape: f32[1,32], index: 4, kind: input, shape index: {}]
  %s5 = inlined_call_operand.vmem [shape: f32[1,32], index: 5, kind: input, shape index: {}]
  %s6 = inlined_call_operand.vmem [shape: f32[1,32], index: 6, kind: input, shape index: {}]
  %s7 = inlined_call_operand.vmem [shape: f32[32,32], index: 7, kind: input, shape index: {}]
  %s8 = inlined_call_operand.vmem [shape: f32[1,32], index: 8, kind: input, shape index: {}]
  %s9 = inlined_call_operand.vmem [shape: f32[1,32], index: 9, kind: input, shape index: {}]
  %s10 = inlined_call_operand.vmem [shape: f32[1,32], index: 10, kind: input, shape index: {}]
  %s11 = inlined_call_operand.vmem [shape: f32[32,32], index: 11, kind: input, shape index: {}]
  %s12 = inlined_call_operand.vmem [shape: f32[1,32], index: 12, kind: input, shape index: {}]
  %s13 = inlined_call_operand.vmem [shape: f32[1,32], index: 13, kind: input, shape index: {}]
  %s14 = inlined_call_operand.vmem [shape: f32[1,32], index: 14, kind: input, shape index: {}]
  %s15 = inlined_call_operand.vmem [shape: f32[32,128], index: 15, kind: input, shape index: {}]
  %s16 = inlined_call_operand.vmem [shape: f32[1,128], index: 16, kind: input, shape index: {}]
  %s17 = inlined_call_operand.vmem [shape: f32[1,128], index: 17, kind: input, shape index: {}]
  %s18 = inlined_call_operand.vmem [shape: f32[1,128], index: 18, kind: input, shape index: {}]
  %s19 = inlined_call_operand.vmem [shape: f32[8,128], index: 19, kind: output, shape index: {}]
  %s20 = sld [smem:[#allocation0]]
  $region86: #{mlp_forward_pallas.1} parent=0
    _
  %s22 = ssub.s32 1, %s20
  %s23 = scalar_select 0, %s22, %s20
  // Predicated region
  $region2: #{mlp_forward_pallas.1} parent=0 // pred_check
    _
  $region3: #{mlp_forward_pallas.1} parent=0 // pred_check_branch
    %25 = sbr.rel (0) target = $region5
  $region4: #{mlp_forward_pallas.1} parent=0 // pred_region
    _
  $region5: #{mlp_forward_pallas.1} parent=0 // pred_fallthru
    _
  // Predicated region
  $region6: #{mlp_forward_pallas.1} parent=0 // pred_check
    _
  $region7: #{mlp_forward_pallas.1} parent=0 // pred_check_branch
    %27 = sbr.rel (0) target = $region9
  $region8: #{mlp_forward_pallas.1} parent=0 // pred_region
    _
  $region9: #{mlp_forward_pallas.1} parent=0 // pred_fallthru
    _
  // Predicated region
  $region10: #{mlp_forward_pallas.1} parent=0 // pred_check
    _
  $region11: #{mlp_forward_pallas.1} parent=0 // pred_check_branch
    %29 = sbr.rel (0) target = $region13
  $region12: #{mlp_forward_pallas.1} parent=0 // pred_region
    _
  $region13: #{mlp_forward_pallas.1} parent=0 // pred_fallthru
    _
  // Predicated region
  $region14: #{mlp_forward_pallas.1} parent=0 // pred_check
    _
  $region15: #{mlp_forward_pallas.1} parent=0 // pred_check_branch
    %31 = sbr.rel (0) target = $region17
  $region16: #{mlp_forward_pallas.1} parent=0 // pred_region
    _
  $region17: #{mlp_forward_pallas.1} parent=0 // pred_fallthru
    _
  // Predicated region
  $region18: #{mlp_forward_pallas.1} parent=0 // pred_check
    _
  $region19: #{mlp_forward_pallas.1} parent=0 // pred_check_branch
    %33 = sbr.rel (0) target = $region21
  $region20: #{mlp_forward_pallas.1} parent=0 // pred_region
    _
  $region21: #{mlp_forward_pallas.1} parent=0 // pred_fallthru
    _
  // Predicated region
  $region22: #{mlp_forward_pallas.1} parent=0 // pred_check
    _
  $region23: #{mlp_forward_pallas.1} parent=0 // pred_check_branch
    %35 = sbr.rel (0) target = $region25
  $region24: #{mlp_forward_pallas.1} parent=0 // pred_region
    _
  $region25: #{mlp_forward_pallas.1} parent=0 // pred_fallthru
    _
  // Predicated region
  $region26: #{mlp_forward_pallas.1} parent=0 // pred_check
    _
  $region27: #{mlp_forward_pallas.1} parent=0 // pred_check_branch
    %37 = sbr.rel (0) target = $region29
  $region28: #{mlp_forward_pallas.1} parent=0 // pred_region
    _
  $region29: #{mlp_forward_pallas.1} parent=0 // pred_fallthru
    _
  // Predicated region
  $region30: #{mlp_forward_pallas.1} parent=0 // pred_check
    _
  $region31: #{mlp_forward_pallas.1} parent=0 // pred_check_branch
    %39 = sbr.rel (0) target = $region33
  $region32: #{mlp_forward_pallas.1} parent=0 // pred_region
    _
  $region33: #{mlp_forward_pallas.1} parent=0 // pred_fallthru
    _
  // Predicated region
  $region34: #{mlp_forward_pallas.1} parent=0 // pred_check
    _
  $region35: #{mlp_forward_pallas.1} parent=0 // pred_check_branch
    %41 = sbr.rel (0) target = $region37
  $region36: #{mlp_forward_pallas.1} parent=0 // pred_region
    _
  $region37: #{mlp_forward_pallas.1} parent=0 // pred_fallthru
    _
  // Predicated region
  $region38: #{mlp_forward_pallas.1} parent=0 // pred_check
    _
  $region39: #{mlp_forward_pallas.1} parent=0 // pred_check_branch
    %43 = sbr.rel (0) target = $region41
  $region40: #{mlp_forward_pallas.1} parent=0 // pred_region
    _
  $region41: #{mlp_forward_pallas.1} parent=0 // pred_fallthru
    _
  // Predicated region
  $region42: #{mlp_forward_pallas.1} parent=0 // pred_check
    _
  $region43: #{mlp_forward_pallas.1} parent=0 // pred_check_branch
    %45 = sbr.rel (0) target = $region45
  $region44: #{mlp_forward_pallas.1} parent=0 // pred_region
    _
  $region45: #{mlp_forward_pallas.1} parent=0 // pred_fallthru
    _
  // Predicated region
  $region46: #{mlp_forward_pallas.1} parent=0 // pred_check
    _
  $region47: #{mlp_forward_pallas.1} parent=0 // pred_check_branch
    %47 = sbr.rel (0) target = $region49
  $region48: #{mlp_forward_pallas.1} parent=0 // pred_region
    _
  $region49: #{mlp_forward_pallas.1} parent=0 // pred_fallthru
    _
  // Predicated region
  $region50: #{mlp_forward_pallas.1} parent=0 // pred_check
    _
  $region51: #{mlp_forward_pallas.1} parent=0 // pred_check_branch
    %49 = sbr.rel (0) target = $region53
  $region52: #{mlp_forward_pallas.1} parent=0 // pred_region
    _
  $region53: #{mlp_forward_pallas.1} parent=0 // pred_fallthru
    _
  // Predicated region
  $region54: #{mlp_forward_pallas.1} parent=0 // pred_check
    _
  $region55: #{mlp_forward_pallas.1} parent=0 // pred_check_branch
    %51 = sbr.rel (0) target = $region57
  $region56: #{mlp_forward_pallas.1} parent=0 // pred_region
    _
  $region57: #{mlp_forward_pallas.1} parent=0 // pred_fallthru
    _
  // Predicated region
  $region58: #{mlp_forward_pallas.1} parent=0 // pred_check
    _
  $region59: #{mlp_forward_pallas.1} parent=0 // pred_check_branch
    %53 = sbr.rel (0) target = $region61
  $region60: #{mlp_forward_pallas.1} parent=0 // pred_region
    _
  $region61: #{mlp_forward_pallas.1} parent=0 // pred_fallthru
    _
  // Predicated region
  $region62: #{mlp_forward_pallas.1} parent=0 // pred_check
    _
  $region63: #{mlp_forward_pallas.1} parent=0 // pred_check_branch
    %55 = sbr.rel (0) target = $region65
  $region64: #{mlp_forward_pallas.1} parent=0 // pred_region
    _
  $region65: #{mlp_forward_pallas.1} parent=0 // pred_fallthru
    _
  // Predicated region
  $region66: #{mlp_forward_pallas.1} parent=0 // pred_check
    _
  $region67: #{mlp_forward_pallas.1} parent=0 // pred_check_branch
    %57 = sbr.rel (0) target = $region69
  $region68: #{mlp_forward_pallas.1} parent=0 // pred_region
    _
  $region69: #{mlp_forward_pallas.1} parent=0 // pred_fallthru
    _
  // Predicated region
  $region70: #{mlp_forward_pallas.1} parent=0 // pred_check
    _
  $region71: #{mlp_forward_pallas.1} parent=0 // pred_check_branch
    %59 = sbr.rel (0) target = $region73
  $region72: #{mlp_forward_pallas.1} parent=0 // pred_region
    _
  $region73: #{mlp_forward_pallas.1} parent=0 // pred_fallthru
    _
  // Predicated region
  $region74: #{mlp_forward_pallas.1} parent=0 // pred_check
    _
  $region75: #{mlp_forward_pallas.1} parent=0 // pred_check_branch
    %61 = sbr.rel (0) target = $region77
  $region76: #{mlp_forward_pallas.1} parent=0 // pred_region
    _
  $region77: #{mlp_forward_pallas.1} parent=0 // pred_fallthru
    _
  %v62 = vld [vmem:[%s1] sm:$0xff]
  %v63 = vld [vmem:[%s2] sm:$0x1]
  %v64 = vld [vmem:[%s15] sm:$0xff]
  %v65 = vld [vmem:[%s15 + $0x8] sm:$0xff]
  %v66 = vld [vmem:[%s15 + $0x10] sm:$0xff]
  %v67 = vld [vmem:[%s15 + $0x18] sm:$0xff]
  %v68 = vld [vmem:[%s16] sm:$0x1]
  %v69 = vld [vmem:[%s17] sm:$0x1]
  %v70 = vld [vmem:[%s18] sm:$0x1]
  %v71 = vld [vmem:[%s0] sm:$0xff]
  %v73 = vperm.slane %v63, 0
  %vm75 = vcmask 64512
  %v77 = vsel %vm75, %v71, 0
  %79 = vmatpush.msra.mxu0 0.0
  %80 = vmatpush.msra.mxu0 0.0
  %81 = vmatpush.msra.mxu0 0.0
  %82 = vmatpush.msra.mxu0 0.0
  %83 = vmatpush.msra.mxu0 0.0
  %84 = vmatpush.msra.mxu0 0.0
  %85 = vmatpush.msra.mxu0 0.0
  %86 = vmatpush.msra.mxu0 0.0
  %87 = vmatpush.msra.mxu0 0.0
  %88 = vmatpush.msra.mxu0 0.0
  %89 = vmatpush.msra.mxu0 0.0
  %90 = vmatpush.msra.mxu0 0.0
  %91 = vmatpush.msra.mxu0 0.0
  %92 = vmatpush.msra.mxu0 0.0
  %93 = vmatpush.msra.mxu0 0.0
  %94 = vmatpush.msra.mxu0 %v62
  %95 = vmatmul.f32.gmra.mxu0 %v77
  %v96 = vpop.f32.mrf.mxu0
  %v97 = vadd.f32 %v73, %v96
  %98 = vdwg.mxu0
  %v99 = vld [vmem:[%s3] sm:$0xff]
  %v100 = vld [vmem:[%s3 + $0x8] sm:$0xff]
  %v101 = vld [vmem:[%s3 + $0x10] sm:$0xff]
  %v102 = vld [vmem:[%s3 + $0x18] sm:$0xff]
  %s103 = scalar_lea.vmem %s0, 8
  %v104 = vld [vmem:[%s103] sm:$0xff]
  %v106 = vsel %vm75, %v104, 0
  %108 = vmatpush.msra.mxu0 0.0
  %109 = vmatpush.msra.mxu0 0.0
  %110 = vmatpush.msra.mxu0 0.0
  %111 = vmatpush.msra.mxu0 0.0
  %112 = vmatpush.msra.mxu0 0.0
  %113 = vmatpush.msra.mxu0 0.0
  %114 = vmatpush.msra.mxu0 0.0
  %115 = vmatpush.msra.mxu0 0.0
  %116 = vmatpush.msra.mxu0 0.0
  %117 = vmatpush.msra.mxu0 0.0
  %118 = vmatpush.msra.mxu0 0.0
  %119 = vmatpush.msra.mxu0 0.0
  %120 = vmatpush.msra.mxu0 0.0
  %121 = vmatpush.msra.mxu0 0.0
  %122 = vmatpush.msra.mxu0 0.0
  %123 = vmatpush.msra.mxu0 %v62
  %124 = vmatmul.f32.gmra.mxu0 %v106
  %v125 = vpop.f32.mrf.mxu0
  %v126 = vadd.f32 %v73, %v125
  %127 = vdwg.mxu0
  %v128 = vld [vmem:[%s3 + $0x20] sm:$0xff]
  %v129 = vld [vmem:[%s3 + $0x28] sm:$0xff]
  %v130 = vld [vmem:[%s3 + $0x30] sm:$0xff]
  %v131 = vld [vmem:[%s3 + $0x38] sm:$0xff]
  %vm132 = vcmask 261120
  %v134 = vsel %vm132, %v126, 0
  %136 = vmatpush.msra.mxu0 0.0
  %137 = vmatpush.msra.mxu0 0.0
  %138 = vmatpush.msra.mxu0 0.0
  %139 = vmatpush.msra.mxu0 0.0
  %140 = vmatpush.msra.mxu0 0.0
  %141 = vmatpush.msra.mxu0 0.0
  %142 = vmatpush.msra.mxu0 0.0
  %143 = vmatpush.msra.mxu0 0.0
  %144 = vmatpush.msra.mxu0 0.0
  %145 = vmatpush.msra.mxu0 0.0
  %146 = vmatpush.msra.mxu0 0.0
  %147 = vmatpush.msra.mxu0 0.0
  %148 = vmatpush.msra.mxu0 %v131
  %149 = vmatpush.msra.mxu0 %v130
  %150 = vmatpush.msra.mxu0 %v129
  %151 = vmatpush.msra.mxu0 %v128
  %152 = vmatmul.f32.gmra.mxu0 %v134
  %v153 = vpop.f32.mrf.mxu0
  %v154 = vadd.f32 0.0, %v153
  %155 = vdwg.mxu0
  %v157 = vsel %vm132, %v97, 0
  %159 = vmatpush.msra.mxu0 0.0
  %160 = vmatpush.msra.mxu0 0.0
  %161 = vmatpush.msra.mxu0 0.0
  %162 = vmatpush.msra.mxu0 0.0
  %163 = vmatpush.msra.mxu0 0.0
  %164 = vmatpush.msra.mxu0 0.0
  %165 = vmatpush.msra.mxu0 0.0
  %166 = vmatpush.msra.mxu0 0.0
  %167 = vmatpush.msra.mxu0 0.0
  %168 = vmatpush.msra.mxu0 0.0
  %169 = vmatpush.msra.mxu0 0.0
  %170 = vmatpush.msra.mxu0 0.0
  %171 = vmatpush.msra.mxu0 %v102
  %172 = vmatpush.msra.mxu0 %v101
  %173 = vmatpush.msra.mxu0 %v100
  %174 = vmatpush.msra.mxu0 %v99
  %175 = vmatmul.f32.gmra.mxu0 %v157
  %v176 = vpop.f32.mrf.mxu0
  %v177 = vadd.f32 %v154, %v176
  %178 = vdwg.mxu0
  %s179 = scalar_lea.vmem %s0, 16
  %v180 = vld [vmem:[%s179] sm:$0xff]
  %v182 = vsel %vm75, %v180, 0
  %184 = vmatpush.msra.mxu0 0.0
  %185 = vmatpush.msra.mxu0 0.0
  %186 = vmatpush.msra.mxu0 0.0
  %187 = vmatpush.msra.mxu0 0.0
  %188 = vmatpush.msra.mxu0 0.0
  %189 = vmatpush.msra.mxu0 0.0
  %190 = vmatpush.msra.mxu0 0.0
  %191 = vmatpush.msra.mxu0 0.0
  %192 = vmatpush.msra.mxu0 0.0
  %193 = vmatpush.msra.mxu0 0.0
  %194 = vmatpush.msra.mxu0 0.0
  %195 = vmatpush.msra.mxu0 0.0
  %196 = vmatpush.msra.mxu0 0.0
  %197 = vmatpush.msra.mxu0 0.0
  %198 = vmatpush.msra.mxu0 0.0
  %199 = vmatpush.msra.mxu0 %v62
  %200 = vmatmul.f32.gmra.mxu0 %v182
  %v201 = vpop.f32.mrf.mxu0
  %v202 = vadd.f32 %v73, %v201
  %203 = vdwg.mxu0
  %v204 = vld [vmem:[%s3 + $0x40] sm:$0xff]
  %v205 = vld [vmem:[%s3 + $0x48] sm:$0xff]
  %v206 = vld [vmem:[%s3 + $0x50] sm:$0xff]
  %v207 = vld [vmem:[%s3 + $0x58] sm:$0xff]
  %v209 = vsel %vm132, %v202, 0
  %211 = vmatpush.msra.mxu0 0.0
  %212 = vmatpush.msra.mxu0 0.0
  %213 = vmatpush.msra.mxu0 0.0
  %214 = vmatpush.msra.mxu0 0.0
  %215 = vmatpush.msra.mxu0 0.0
  %216 = vmatpush.msra.mxu0 0.0
  %217 = vmatpush.msra.mxu0 0.0
  %218 = vmatpush.msra.mxu0 0.0
  %219 = vmatpush.msra.mxu0 0.0
  %220 = vmatpush.msra.mxu0 0.0
  %221 = vmatpush.msra.mxu0 0.0
  %222 = vmatpush.msra.mxu0 0.0
  %223 = vmatpush.msra.mxu0 %v207
  %224 = vmatpush.msra.mxu0 %v206
  %225 = vmatpush.msra.mxu0 %v205
  %226 = vmatpush.msra.mxu0 %v204
  %227 = vmatmul.f32.gmra.mxu0 %v209
  %v228 = vpop.f32.mrf.mxu0
  %v229 = vadd.f32 0.0, %v228
  %230 = vdwg.mxu0
  %v231 = vadd.f32 %v177, %v229
  %s232 = scalar_lea.vmem %s0, 24
  %v233 = vld [vmem:[%s232] sm:$0xff]
  %v235 = vsel %vm75, %v233, 0
  %237 = vmatpush.msra.mxu0 0.0
  %238 = vmatpush.msra.mxu0 0.0
  %239 = vmatpush.msra.mxu0 0.0
  %240 = vmatpush.msra.mxu0 0.0
  %241 = vmatpush.msra.mxu0 0.0
  %242 = vmatpush.msra.mxu0 0.0
  %243 = vmatpush.msra.mxu0 0.0
  %244 = vmatpush.msra.mxu0 0.0
  %245 = vmatpush.msra.mxu0 0.0
  %246 = vmatpush.msra.mxu0 0.0
  %247 = vmatpush.msra.mxu0 0.0
  %248 = vmatpush.msra.mxu0 0.0
  %249 = vmatpush.msra.mxu0 0.0
  %250 = vmatpush.msra.mxu0 0.0
  %251 = vmatpush.msra.mxu0 0.0
  %252 = vmatpush.msra.mxu0 %v62
  %253 = vmatmul.f32.gmra.mxu0 %v235
  %v254 = vpop.f32.mrf.mxu0
  %v255 = vadd.f32 %v73, %v254
  %256 = vdwg.mxu0
  %v257 = vld [vmem:[%s3 + $0x60] sm:$0xff]
  %v258 = vld [vmem:[%s3 + $0x68] sm:$0xff]
  %v259 = vld [vmem:[%s3 + $0x70] sm:$0xff]
  %v260 = vld [vmem:[%s3 + $0x78] sm:$0xff]
  %v262 = vsel %vm132, %v255, 0
  %264 = vmatpush.msra.mxu0 0.0
  %265 = vmatpush.msra.mxu0 0.0
  %266 = vmatpush.msra.mxu0 0.0
  %267 = vmatpush.msra.mxu0 0.0
  %268 = vmatpush.msra.mxu0 0.0
  %269 = vmatpush.msra.mxu0 0.0
  %270 = vmatpush.msra.mxu0 0.0
  %271 = vmatpush.msra.mxu0 0.0
  %272 = vmatpush.msra.mxu0 0.0
  %273 = vmatpush.msra.mxu0 0.0
  %274 = vmatpush.msra.mxu0 0.0
  %275 = vmatpush.msra.mxu0 0.0
  %276 = vmatpush.msra.mxu0 %v260
  %277 = vmatpush.msra.mxu0 %v259
  %278 = vmatpush.msra.mxu0 %v258
  %279 = vmatpush.msra.mxu0 %v257
  %280 = vmatmul.f32.gmra.mxu0 %v262
  %v281 = vpop.f32.mrf.mxu0
  %v282 = vadd.f32 0.0, %v281
  %283 = vdwg.mxu0
  %v284 = vadd.f32 %v231, %v282
  %v285 = vld [vmem:[%s4] sm:$0x1]
  %v287 = vperm.slane %v285, 0
  %v289 = vadd.f32 %v284, %v287
  %v290 = vld [vmem:[%s5] sm:$0x1]
  %v291 = vld [vmem:[%s6] sm:$0x1]
  %v292 = vsel %vm132, %v289, 0.0
  %293 = vadd.xlane.f32.xlu0 %v292
  %v294 = vpop.xlane.xlu0 %293
  %v295 = vrcp.pop 32.0
  %v296 = vmul.f32 32.0, %v295
  %v297 = vsub.f32 1.0, %v296
  %v298 = vmul.f32 %v295, %v297
  %v299 = vadd.f32 %v295, %v298
  %vm300 = vweird.f32 %v295
  %v301 = vsel %vm300, %v295, %v299
  %v302 = vmul.f32 %v294, %v301
  %v303 = vsub.f32 %v289, %v302
  %v304 = vmul.f32 %v303, %v303
  %v305 = vsel %vm132, %v304, 0.0
  %306 = vadd.xlane.f32.xlu0 %v305
  %v307 = vpop.xlane.xlu0 %306
  %v308 = vmul.f32 %v307, %v301
  %v309 = vadd.f32 %v308, 1e-05
  %v310 = vrsqrt.pop %v309
  %v311 = vmul.f32 %v310, %v309
  %v312 = vmul.f32 %v311, %v310
  %v313 = vmul.f32 0.5, %v312
  %v314 = vsub.f32 1.5, %v313
  %v315 = vmul.f32 %v310, %v314
  %vm316 = vweird.f32 %v309
  %vm317 = vweird.f32 %v310
  %vm318 = vmor %vm316, %vm317
  %v319 = vsel %vm318, %v310, %v315
  %v320 = vmul.f32 %v303, %v319
  %v322 = vperm.slane %v290, 0
  %v324 = vmul.f32 %v320, %v322
  %v326 = vperm.slane %v291, 0
  %v328 = vadd.f32 %v324, %v326
  %v329 = vmax.f32 %v328, 0.0
  %v330 = vld [vmem:[%s7] sm:$0xff]
  %v331 = vld [vmem:[%s7 + $0x8] sm:$0xff]
  %v332 = vld [vmem:[%s7 + $0x10] sm:$0xff]
  %v333 = vld [vmem:[%s7 + $0x18] sm:$0xff]
  %v334 = vld [vmem:[%s8] sm:$0x1]
  %v336 = vperm.slane %v334, 0
  %v339 = vsel %vm132, %v329, 0
  %341 = vmatpush.msra.mxu0 0.0
  %342 = vmatpush.msra.mxu0 0.0
  %343 = vmatpush.msra.mxu0 0.0
  %344 = vmatpush.msra.mxu0 0.0
  %345 = vmatpush.msra.mxu0 0.0
  %346 = vmatpush.msra.mxu0 0.0
  %347 = vmatpush.msra.mxu0 0.0
  %348 = vmatpush.msra.mxu0 0.0
  %349 = vmatpush.msra.mxu0 0.0
  %350 = vmatpush.msra.mxu0 0.0
  %351 = vmatpush.msra.mxu0 0.0
  %352 = vmatpush.msra.mxu0 0.0
  %353 = vmatpush.msra.mxu0 %v333
  %354 = vmatpush.msra.mxu0 %v332
  %355 = vmatpush.msra.mxu0 %v331
  %356 = vmatpush.msra.mxu0 %v330
  %357 = vmatmul.f32.gmra.mxu0 %v339
  %v358 = vpop.f32.mrf.mxu0
  %v359 = vadd.f32 %v336, %v358
  %360 = vdwg.mxu0
  %v361 = vld [vmem:[%s9] sm:$0x1]
  %v362 = vld [vmem:[%s10] sm:$0x1]
  %v363 = vsel %vm132, %v359, 0.0
  %364 = vadd.xlane.f32.xlu0 %v363
  %v365 = vpop.xlane.xlu0 %364
  %v366 = vmul.f32 %v365, %v301
  %v367 = vsub.f32 %v359, %v366
  %v368 = vmul.f32 %v367, %v367
  %v369 = vsel %vm132, %v368, 0.0
  %370 = vadd.xlane.f32.xlu0 %v369
  %v371 = vpop.xlane.xlu0 %370
  %v372 = vmul.f32 %v371, %v301
  %v373 = vadd.f32 %v372, 1e-05
  %v374 = vrsqrt.pop %v373
  %v375 = vmul.f32 %v374, %v373
  %v376 = vmul.f32 %v375, %v374
  %v377 = vmul.f32 0.5, %v376
  %v378 = vsub.f32 1.5, %v377
  %v379 = vmul.f32 %v374, %v378
  %vm380 = vweird.f32 %v373
  %vm381 = vweird.f32 %v374
  %vm382 = vmor %vm380, %vm381
  %v383 = vsel %vm382, %v374, %v379
  %v384 = vmul.f32 %v367, %v383
  %v386 = vperm.slane %v361, 0
  %v388 = vmul.f32 %v384, %v386
  %v390 = vperm.slane %v362, 0
  %v392 = vadd.f32 %v388, %v390
  %v393 = vmax.f32 %v392, 0.0
  %v394 = vld [vmem:[%s11] sm:$0xff]
  %v395 = vld [vmem:[%s11 + $0x8] sm:$0xff]
  %v396 = vld [vmem:[%s11 + $0x10] sm:$0xff]
  %v397 = vld [vmem:[%s11 + $0x18] sm:$0xff]
  %v398 = vld [vmem:[%s12] sm:$0x1]
  %v400 = vperm.slane %v398, 0
  %v403 = vsel %vm132, %v393, 0
  %405 = vmatpush.msra.mxu0 0.0
  %406 = vmatpush.msra.mxu0 0.0
  %407 = vmatpush.msra.mxu0 0.0
  %408 = vmatpush.msra.mxu0 0.0
  %409 = vmatpush.msra.mxu0 0.0
  %410 = vmatpush.msra.mxu0 0.0
  %411 = vmatpush.msra.mxu0 0.0
  %412 = vmatpush.msra.mxu0 0.0
  %413 = vmatpush.msra.mxu0 0.0
  %414 = vmatpush.msra.mxu0 0.0
  %415 = vmatpush.msra.mxu0 0.0
  %416 = vmatpush.msra.mxu0 0.0
  %417 = vmatpush.msra.mxu0 %v397
  %418 = vmatpush.msra.mxu0 %v396
  %419 = vmatpush.msra.mxu0 %v395
  %420 = vmatpush.msra.mxu0 %v394
  %421 = vmatmul.f32.gmra.mxu0 %v403
  %v422 = vpop.f32.mrf.mxu0
  %v423 = vadd.f32 %v400, %v422
  %424 = vdwg.mxu0
  %v425 = vld [vmem:[%s13] sm:$0x1]
  %v426 = vld [vmem:[%s14] sm:$0x1]
  %v427 = vsel %vm132, %v423, 0.0
  %428 = vadd.xlane.f32.xlu0 %v427
  %v429 = vpop.xlane.xlu0 %428
  %v430 = vmul.f32 %v429, %v301
  %v431 = vsub.f32 %v423, %v430
  %v432 = vmul.f32 %v431, %v431
  %v433 = vsel %vm132, %v432, 0.0
  %434 = vadd.xlane.f32.xlu0 %v433
  %v435 = vpop.xlane.xlu0 %434
  %v436 = vmul.f32 %v435, %v301
  %v437 = vadd.f32 %v436, 1e-05
  %v438 = vrsqrt.pop %v437
  %v439 = vmul.f32 %v438, %v437
  %v440 = vmul.f32 %v439, %v438
  %v441 = vmul.f32 0.5, %v440
  %v442 = vsub.f32 1.5, %v441
  %v443 = vmul.f32 %v438, %v442
  %vm444 = vweird.f32 %v437
  %vm445 = vweird.f32 %v438
  %vm446 = vmor %vm444, %vm445
  %v447 = vsel %vm446, %v438, %v443
  %v448 = vmul.f32 %v431, %v447
  %v450 = vperm.slane %v425, 0
  %v452 = vmul.f32 %v448, %v450
  %v454 = vperm.slane %v426, 0
  %v456 = vadd.f32 %v452, %v454
  %v457 = vmax.f32 %v456, 0.0
  %v459 = vperm.slane %v68, 0
  %v462 = vsel %vm132, %v457, 0
  %464 = vmatpush.msra.mxu0 0.0
  %465 = vmatpush.msra.mxu0 0.0
  %466 = vmatpush.msra.mxu0 0.0
  %467 = vmatpush.msra.mxu0 0.0
  %468 = vmatpush.msra.mxu0 0.0
  %469 = vmatpush.msra.mxu0 0.0
  %470 = vmatpush.msra.mxu0 0.0
  %471 = vmatpush.msra.mxu0 0.0
  %472 = vmatpush.msra.mxu0 0.0
  %473 = vmatpush.msra.mxu0 0.0
  %474 = vmatpush.msra.mxu0 0.0
  %475 = vmatpush.msra.mxu0 0.0
  %476 = vmatpush.msra.mxu0 %v67
  %477 = vmatpush.msra.mxu0 %v66
  %478 = vmatpush.msra.mxu0 %v65
  %479 = vmatpush.msra.mxu0 %v64
  %480 = vmatmul.f32.gmra.mxu0 %v462
  %v481 = vpop.f32.mrf.mxu0
  %v482 = vadd.f32 %v459, %v481
  %483 = vdwg.mxu0
  %v484 = vlaneseq
  %v485 = vand.u32 %v484, 127
  %vm486 = vcmp.lt.s32.totalorder %v485, 16
  %v487 = vsel %vm486, %v482, 0.0
  %488 = vadd.xlane.f32.xlu0 %v487
  %v489 = vpop.xlane.xlu0 %488
  %v490 = vrcp.pop 16.0
  %v491 = vmul.f32 16.0, %v490
  %v492 = vsub.f32 1.0, %v491
  %v493 = vmul.f32 %v490, %v492
  %v494 = vadd.f32 %v490, %v493
  %vm495 = vweird.f32 %v490
  %v496 = vsel %vm495, %v490, %v494
  %v497 = vmul.f32 %v489, %v496
  %v498 = vsub.f32 %v482, %v497
  %v499 = vsel %vm486, %v498, 0.0
  %v500 = vmul.f32 %v499, %v499
  %501 = vadd.xlane.f32.xlu0 %v500
  %v502 = vpop.xlane.xlu0 %501
  %v503 = vmul.f32 %v502, %v496
  %v504 = vadd.f32 %v503, 1e-05
  %v505 = vrsqrt.pop %v504
  %v506 = vmul.f32 %v505, %v504
  %v507 = vmul.f32 %v506, %v505
  %v508 = vmul.f32 0.5, %v507
  %v509 = vsub.f32 1.5, %v508
  %v510 = vmul.f32 %v505, %v509
  %vm511 = vweird.f32 %v504
  %vm512 = vweird.f32 %v505
  %vm513 = vmor %vm511, %vm512
  %v514 = vsel %vm513, %v505, %v510
  %v515 = vmul.f32 %v498, %v514
  %v517 = vperm.slane %v69, 0
  %v519 = vmul.f32 %v515, %v517
  %v521 = vperm.slane %v70, 0
  %v523 = vadd.f32 %v519, %v521
  %v524 = vsel %vm486, %v523, -inf
  %525 = vmax.xlane.f32.xlu0 %v524
  %v526 = vpop.xlane.xlu0 %525
  %v527 = vsub.f32 %v523, %v526
  %v528 = vmul.f32 %v527, 1.442695
  %v529 = vpow.pop %v528
  %v530 = vsel %vm486, %v529, 0.0
  %531 = vadd.xlane.f32.xlu0 %v530
  %v532 = vpop.xlane.xlu0 %531
  %v533 = vrcp.pop %v532
  %v534 = vmul.f32 %v532, %v533
  %v535 = vsub.f32 1.0, %v534
  %v536 = vmul.f32 %v533, %v535
  %v537 = vadd.f32 %v533, %v536
  %vm538 = vweird.f32 %v532
  %vm539 = vweird.f32 %v533
  %vm540 = vmor %vm538, %vm539
  %v541 = vsel %vm540, %v533, %v537
  %v542 = vand.u32 2147483647, %v532
  %vm543 = vcmp.eq.f32.partialorder %v542, 8.507059e+37
  %v544 = vand.u32 %v532, 2147483648
  %v545 = vor.u32 1.1754944e-38, %v544
  %v546 = vsel %vm543, %v545, %v541
  %v547 = vmul.f32 %v530, %v546
  %548 = vst [vmem:[%s19] sm:$0xff] %v547
  // Predicated region
  $region78: #{mlp_forward_pallas.1} parent=0 // pred_check
    _
  $region79: #{mlp_forward_pallas.1} parent=0 // pred_check_branch
    %550 = sbr.rel (0) target = $region81
  $region80: #{mlp_forward_pallas.1} parent=0 // pred_region
    _
  $region81: #{mlp_forward_pallas.1} parent=0 // pred_fallthru
    _
  // Predicated region
  $region82: #{mlp_forward_pallas.1} parent=0 // pred_check
    _
  $region83: #{mlp_forward_pallas.1} parent=0 // pred_check_branch
    %552 = sbr.rel (0) target = $region85
  $region84: #{mlp_forward_pallas.1} parent=0 // pred_region
    _
  $region85: #{mlp_forward_pallas.1} parent=0 // pred_fallthru
    _

</llo_original>
